<compile_context>
chip_gen: v7x
topology: tpu7x:2x2x1
jax: 0.10.0
libtpu: 0.0.40
codegen_flags: <defaults>
</compile_context>

<pallas_src>
import functools
import math

import jax
import jax.numpy as jnp
from jax.experimental import pallas as pl
from jax.experimental.pallas import tpu as pltpu


def dwconv_bn_relu_kernel(x_ref, k_ref, m_ref, b_ref, o_ref, *, width,
                          apply_relu):
    # x_ref : (tbc, HW)   input rows (one (H,W) image per row), lanes = h*w
    # k_ref : (tbc, 9)    depthwise 3x3 weights (BN scale folded in), per row
    # m_ref : (9, HW)     per-tap border masks (1.0 in-bounds, 0.0 padding)
    # b_ref : (tbc, 1)    folded BN bias (beta - mean*scale)
    # o_ref : (tbc, HW)
    _, hw = x_ref.shape

    x = x_ref[...].astype(jnp.float32)     # single cast of the whole tile
    k = k_ref[...]                         # (tbc, 9) f32
    m = m_ref[...]                         # (9, HW)  f32

    acc = None
    for dh in range(3):
        for dw in range(3):
            t = dh * 3 + dw
            # rolled[j] = x[j + (dh-1)*W + (dw-1)]  (jnp.roll semantics)
            shift = (-((dh - 1) * width + (dw - 1))) % hw
            xs = pltpu.roll(x, shift, 1) if shift else x
            term = xs * k[:, t:t + 1]
            if t != 4:                     # center tap never reads out of bounds
                term = term * m[t:t + 1, :]
            acc = term if acc is None else acc + term

    y = acc + b_ref[...]
    if apply_relu:
        y = jnp.maximum(y, 0.0)
    o_ref[...] = y.astype(o_ref.dtype)


def _vmem_budget_bytes():
    """Generation-aware VMEM budget (v5e/v6e: 128 MiB, v7x: 64 MiB per TC)."""
    cap = 64 << 20  # conservative default
    try:
        cap = int(pltpu.get_tpu_info().vmem_capacity_bytes)
    except Exception:
        pass
    return int(cap * 0.7), cap


def _pick_row_tile(rows, c, hw, itemsize, budget):
    """Largest row tile (rows = B*C) fitting the VMEM budget.

    Constraints: divides rows; multiple of 8 (sublanes) or == rows; and either
    a multiple of C or a divisor of C (so each block maps to a fixed channel
    pattern).  Prefers >=2 grid steps (megacore / 2-TC sharding) when possible.
    """
    # double-buffered in + out blocks plus ~4 f32 full-tile temporaries
    per_row = hw * (2 * itemsize + 2 * itemsize + 4 * 4)
    feasible = []
    for t in range(1, rows + 1):
        if rows % t:
            continue
        if not (t % 8 == 0 or t == rows):
            continue
        if not (t % c == 0 or c % t == 0):
            continue
        feasible.append(t)
    if not feasible:            # unreachable (t == rows always qualifies)
        return rows
    fitting = [t for t in feasible if t * per_row <= budget]
    if not fitting:
        # TODO(synk): fall back to spatial (H) tiling with halos here.
        return min(feasible)
    multi = [t for t in fitting if rows // t >= 2]
    pool = multi if multi else fitting
    return max(pool)


def dwconv_bn_relu_forward(x_nchw, conv_w, gamma, beta, running_mean,
                           running_var, eps=1e-5, relu=True):
    b, c, h, w = x_nchw.shape
    kc, ki, kh, kw = conv_w.shape
    assert kc == c and ki == 1 and (kh, kw) == (3, 3), \
        "only depthwise 3x3, stride=1, padding=1 supported"

    hw = h * w
    rows = b * c

    # Fold eval-mode BatchNorm: scale goes into the conv weights, bias stays.
    scale = gamma.astype(jnp.float32) / jnp.sqrt(
        running_var.astype(jnp.float32) + eps)
    bias = beta.astype(jnp.float32) - running_mean.astype(jnp.float32) * scale
    k = conv_w.reshape(c, 9).astype(jnp.float32) * scale[:, None]   # (C, 9)

    # Per-tap border masks over the folded (h*w) lane axis.  These replace the
    # zero-padded scratch copy of the previous version.
    hi = jnp.arange(h)
    wi = jnp.arange(w)
    mtaps = []
    for dh in range(3):
        mh = ((hi + dh - 1) >= 0) & ((hi + dh - 1) < h)
        for dw in range(3):
            mw = ((wi + dw - 1) >= 0) & ((wi + dw - 1) < w)
            mtaps.append((mh[:, None] & mw[None, :]).reshape(hw))
    masks = jnp.stack(mtaps).astype(jnp.float32)                     # (9, HW)

    # (B, C, H, W) -> (B*C, H*W): a free reshape, no transpose / pad passes.
    x2d = x_nchw.reshape(rows, hw)

    itemsize = jnp.dtype(x_nchw.dtype).itemsize
    budget, cap = _vmem_budget_bytes()
    tbc = _pick_row_tile(rows, c, hw, itemsize, budget)

    # Replicate weights/bias so every row-block sees its channels' parameters.
    lcm_rc = tbc * c // math.gcd(tbc, c)
    k_arr = jnp.tile(k, (lcm_rc // c, 1))                            # (L, 9)
    b_arr = jnp.tile(bias.reshape(c, 1), (lcm_rc // c, 1))           # (L, 1)
    n_wblocks = lcm_rc // tbc
    if n_wblocks == 1:
        w_index = lambda i: (0, 0)
    else:
        w_index = lambda i, n=n_wblocks: (i % n, 0)

    ws = tbc * hw * (2 * itemsize + 2 * itemsize + 4 * 4) + lcm_rc * 10 * 4
    vmem_limit = int(min(max(ws + (8 << 20), 32 << 20), int(cap * 0.9)))

    out2d = pl.pallas_call(
        functools.partial(dwconv_bn_relu_kernel, width=w, apply_relu=relu),
        out_shape=jax.ShapeDtypeStruct((rows, hw), x_nchw.dtype),
        grid=(rows // tbc,),
        in_specs=[
            pl.BlockSpec((tbc, hw), lambda i: (i, 0)),    # input rows
            pl.BlockSpec((tbc, 9), w_index),              # scaled dw weights
            pl.BlockSpec((9, hw), lambda i: (0, 0)),      # border masks
            pl.BlockSpec((tbc, 1), w_index),              # folded BN bias
        ],
        out_specs=pl.BlockSpec((tbc, hw), lambda i: (i, 0)),
        compiler_params=pltpu.CompilerParams(
            dimension_semantics=("parallel",),
            vmem_limit_bytes=vmem_limit,
        ),
    )(x2d, k_arr, masks, b_arr)

    return out2d.reshape(b, c, h, w)


def dwconv_bn_relu_ref(x, conv_w, gamma, beta, running_mean, running_var,
                       eps=1e-5, relu=True):
    # Pure-JAX reference mirroring the PyTorch forward (eval-mode BN).
    c = x.shape[1]
    y = jax.lax.conv_general_dilated(
        x, conv_w, window_strides=(1, 1), padding=((1, 1), (1, 1)),
        feature_group_count=c,
        dimension_numbers=("NCHW", "OIHW", "NCHW"))
    scale = gamma / jnp.sqrt(running_var + eps)
    shift = beta - running_mean * scale
    y = y * scale[None, :, None, None] + shift[None, :, None, None]
    if relu:
        y = jnp.maximum(y, 0.0)
    return y


if __name__ == "__main__":
    key = jax.random.PRNGKey(0)

    def make_case(k, b, c, h, w):
        k1, k2, k3, k4, k5, k6 = jax.random.split(k, 6)
        x = jax.random.normal(k1, (b, c, h, w), jnp.float32)
        conv_w = jax.random.normal(k2, (c, 1, 3, 3), jnp.float32) * 0.3
        gamma = 1.0 + 0.1 * jax.random.normal(k3, (c,), jnp.float32)
        beta = 0.1 * jax.random.normal(k4, (c,), jnp.float32)
        mean = 0.1 * jax.random.normal(k5, (c,), jnp.float32)
        var = jnp.abs(jax.random.normal(k6, (c,), jnp.float32)) + 0.5
        return x, conv_w, gamma, beta, mean, var

    # Primary shape plus cases that exercise channel-sub-tiled weight indexing
    # (C > row tile) and weight replication across batch samples (C < row tile).
    cases = [(2, 8, 16, 16), (1, 16, 16, 16), (2, 4, 16, 16)]
    keys = jax.random.split(key, len(cases))

    all_ok = True
    for kk, (b, c, h, w) in zip(keys, cases):
        args = make_case(kk, b, c, h, w)
        out = dwconv_bn_relu_forward(*args, eps=1e-5, relu=True)
        out = jax.block_until_ready(out)
        ref = dwconv_bn_relu_ref(*args, eps=1e-5, relu=True)
        all_ok = all_ok and bool(jnp.allclose(out, ref, atol=1e-4, rtol=1e-4))

    assert all_ok, "kernel/reference mismatch"
    print("KERNEL_OK")
</pallas_src>

<mosaic_0001>
module attributes {stable_mosaic.version = 11 : i64} {
  func.func @dwconv_bn_relu_kernel(%arg0: i32, %arg1: memref<8x256xf32, #tpu.memory_space<vmem>>, %arg2: memref<8x9xf32, #tpu.memory_space<vmem>>, %arg3: memref<9x256xf32, #tpu.memory_space<vmem>>, %arg4: memref<8x1xf32, #tpu.memory_space<vmem>>, %arg5: memref<8x256xf32, #tpu.memory_space<vmem>>) attributes {dimension_semantics = [#tpu.dimension_semantics<parallel>], iteration_bounds = array<i64: 2>, scalar_prefetch = 0 : i64, scratch_operands = 0 : i64, tpu.core_type = #tpu.core_type<tc>, window_params = [{transform_indices = @transform_0, window_bounds = array<i64: 8, 256>}, {pipeline_mode = #tpu.pipeline_mode<synchronous>, transform_indices = @transform_1, window_bounds = array<i64: 8, 9>}, {pipeline_mode = #tpu.pipeline_mode<synchronous>, transform_indices = @transform_2, window_bounds = array<i64: 9, 256>}, {pipeline_mode = #tpu.pipeline_mode<synchronous>, transform_indices = @transform_3, window_bounds = array<i64: 8, 1>}, {transform_indices = @transform_4, window_bounds = array<i64: 8, 256>}]} {
    %c0 = arith.constant 0 : index
    %c0_0 = arith.constant 0 : index
    %0 = vector.load %arg1[%c0, %c0_0] : memref<8x256xf32, #tpu.memory_space<vmem>>, vector<8x256xf32>
    %c0_1 = arith.constant 0 : index
    %c0_2 = arith.constant 0 : index
    %1 = vector.load %arg2[%c0_1, %c0_2] : memref<8x9xf32, #tpu.memory_space<vmem>>, vector<8x9xf32>
    %c0_3 = arith.constant 0 : index
    %c0_4 = arith.constant 0 : index
    %2 = vector.load %arg3[%c0_3, %c0_4] : memref<9x256xf32, #tpu.memory_space<vmem>>, vector<9x256xf32>
    %c17_i32 = arith.constant 17 : i32
    %3 = tpu.dynamic_rotate %0 by %c17_i32 dim 1 : vector<8x256xf32>, i32 -> vector<8x256xf32>
    %4 = vector.extract_strided_slice %1 {offsets = [0, 0], sizes = [8, 1], strides = [1, 1]} : vector<8x9xf32> to vector<8x1xf32>
    %5 = vector.broadcast %4 : vector<8x1xf32> to vector<8x256xf32>
    %6 = arith.mulf %3, %5 : vector<8x256xf32>
    %7 = vector.extract_strided_slice %2 {offsets = [0, 0], sizes = [1, 256], strides = [1, 1]} : vector<9x256xf32> to vector<1x256xf32>
    %8 = vector.broadcast %7 : vector<1x256xf32> to vector<8x256xf32>
    %9 = arith.mulf %6, %8 : vector<8x256xf32>
    %c16_i32 = arith.constant 16 : i32
    %10 = tpu.dynamic_rotate %0 by %c16_i32 dim 1 : vector<8x256xf32>, i32 -> vector<8x256xf32>
    %11 = vector.extract_strided_slice %1 {offsets = [0, 1], sizes = [8, 1], strides = [1, 1]} : vector<8x9xf32> to vector<8x1xf32>
    %12 = vector.broadcast %11 : vector<8x1xf32> to vector<8x256xf32>
    %13 = arith.mulf %10, %12 : vector<8x256xf32>
    %14 = vector.extract_strided_slice %2 {offsets = [1, 0], sizes = [1, 256], strides = [1, 1]} : vector<9x256xf32> to vector<1x256xf32>
    %15 = vector.broadcast %14 : vector<1x256xf32> to vector<8x256xf32>
    %16 = arith.mulf %13, %15 : vector<8x256xf32>
    %17 = arith.addf %9, %16 : vector<8x256xf32>
    %c15_i32 = arith.constant 15 : i32
    %18 = tpu.dynamic_rotate %0 by %c15_i32 dim 1 : vector<8x256xf32>, i32 -> vector<8x256xf32>
    %19 = vector.extract_strided_slice %1 {offsets = [0, 2], sizes = [8, 1], strides = [1, 1]} : vector<8x9xf32> to vector<8x1xf32>
    %20 = vector.broadcast %19 : vector<8x1xf32> to vector<8x256xf32>
    %21 = arith.mulf %18, %20 : vector<8x256xf32>
    %22 = vector.extract_strided_slice %2 {offsets = [2, 0], sizes = [1, 256], strides = [1, 1]} : vector<9x256xf32> to vector<1x256xf32>
    %23 = vector.broadcast %22 : vector<1x256xf32> to vector<8x256xf32>
    %24 = arith.mulf %21, %23 : vector<8x256xf32>
    %25 = arith.addf %17, %24 : vector<8x256xf32>
    %c1_i32 = arith.constant 1 : i32
    %26 = tpu.dynamic_rotate %0 by %c1_i32 dim 1 : vector<8x256xf32>, i32 -> vector<8x256xf32>
    %27 = vector.extract_strided_slice %1 {offsets = [0, 3], sizes = [8, 1], strides = [1, 1]} : vector<8x9xf32> to vector<8x1xf32>
    %28 = vector.broadcast %27 : vector<8x1xf32> to vector<8x256xf32>
    %29 = arith.mulf %26, %28 : vector<8x256xf32>
    %30 = vector.extract_strided_slice %2 {offsets = [3, 0], sizes = [1, 256], strides = [1, 1]} : vector<9x256xf32> to vector<1x256xf32>
    %31 = vector.broadcast %30 : vector<1x256xf32> to vector<8x256xf32>
    %32 = arith.mulf %29, %31 : vector<8x256xf32>
    %33 = arith.addf %25, %32 : vector<8x256xf32>
    %34 = vector.extract_strided_slice %1 {offsets = [0, 4], sizes = [8, 1], strides = [1, 1]} : vector<8x9xf32> to vector<8x1xf32>
    %35 = vector.broadcast %34 : vector<8x1xf32> to vector<8x256xf32>
    %36 = arith.mulf %0, %35 : vector<8x256xf32>
    %37 = arith.addf %33, %36 : vector<8x256xf32>
    %c255_i32 = arith.constant 255 : i32
    %38 = tpu.dynamic_rotate %0 by %c255_i32 dim 1 : vector<8x256xf32>, i32 -> vector<8x256xf32>
    %39 = vector.extract_strided_slice %1 {offsets = [0, 5], sizes = [8, 1], strides = [1, 1]} : vector<8x9xf32> to vector<8x1xf32>
    %40 = vector.broadcast %39 : vector<8x1xf32> to vector<8x256xf32>
    %41 = arith.mulf %38, %40 : vector<8x256xf32>
    %42 = vector.extract_strided_slice %2 {offsets = [5, 0], sizes = [1, 256], strides = [1, 1]} : vector<9x256xf32> to vector<1x256xf32>
    %43 = vector.broadcast %42 : vector<1x256xf32> to vector<8x256xf32>
    %44 = arith.mulf %41, %43 : vector<8x256xf32>
    %45 = arith.addf %37, %44 : vector<8x256xf32>
    %c241_i32 = arith.constant 241 : i32
    %46 = tpu.dynamic_rotate %0 by %c241_i32 dim 1 : vector<8x256xf32>, i32 -> vector<8x256xf32>
    %47 = vector.extract_strided_slice %1 {offsets = [0, 6], sizes = [8, 1], strides = [1, 1]} : vector<8x9xf32> to vector<8x1xf32>
    %48 = vector.broadcast %47 : vector<8x1xf32> to vector<8x256xf32>
    %49 = arith.mulf %46, %48 : vector<8x256xf32>
    %50 = vector.extract_strided_slice %2 {offsets = [6, 0], sizes = [1, 256], strides = [1, 1]} : vector<9x256xf32> to vector<1x256xf32>
    %51 = vector.broadcast %50 : vector<1x256xf32> to vector<8x256xf32>
    %52 = arith.mulf %49, %51 : vector<8x256xf32>
    %53 = arith.addf %45, %52 : vector<8x256xf32>
    %c240_i32 = arith.constant 240 : i32
    %54 = tpu.dynamic_rotate %0 by %c240_i32 dim 1 : vector<8x256xf32>, i32 -> vector<8x256xf32>
    %55 = vector.extract_strided_slice %1 {offsets = [0, 7], sizes = [8, 1], strides = [1, 1]} : vector<8x9xf32> to vector<8x1xf32>
    %56 = vector.broadcast %55 : vector<8x1xf32> to vector<8x256xf32>
    %57 = arith.mulf %54, %56 : vector<8x256xf32>
    %58 = vector.extract_strided_slice %2 {offsets = [7, 0], sizes = [1, 256], strides = [1, 1]} : vector<9x256xf32> to vector<1x256xf32>
    %59 = vector.broadcast %58 : vector<1x256xf32> to vector<8x256xf32>
    %60 = arith.mulf %57, %59 : vector<8x256xf32>
    %61 = arith.addf %53, %60 : vector<8x256xf32>
    %c239_i32 = arith.constant 239 : i32
    %62 = tpu.dynamic_rotate %0 by %c239_i32 dim 1 : vector<8x256xf32>, i32 -> vector<8x256xf32>
    %63 = vector.extract_strided_slice %1 {offsets = [0, 8], sizes = [8, 1], strides = [1, 1]} : vector<8x9xf32> to vector<8x1xf32>
    %64 = vector.broadcast %63 : vector<8x1xf32> to vector<8x256xf32>
    %65 = arith.mulf %62, %64 : vector<8x256xf32>
    %66 = vector.extract_strided_slice %2 {offsets = [8, 0], sizes = [1, 256], strides = [1, 1]} : vector<9x256xf32> to vector<1x256xf32>
    %67 = vector.broadcast %66 : vector<1x256xf32> to vector<8x256xf32>
    %68 = arith.mulf %65, %67 : vector<8x256xf32>
    %69 = arith.addf %61, %68 : vector<8x256xf32>
    %c0_5 = arith.constant 0 : index
    %c0_6 = arith.constant 0 : index
    %70 = vector.load %arg4[%c0_5, %c0_6] : memref<8x1xf32, #tpu.memory_space<vmem>>, vector<8x1xf32>
    %71 = vector.broadcast %70 : vector<8x1xf32> to vector<8x256xf32>
    %72 = arith.addf %69, %71 : vector<8x256xf32>
    %cst = arith.constant 0.000000e+00 : f32
    %73 = vector.broadcast %cst : f32 to vector<8x256xf32>
    %74 = arith.maximumf %72, %73 : vector<8x256xf32>
    %c0_7 = arith.constant 0 : index
    %c0_8 = arith.constant 0 : index
    %75 = vector.load %arg5[%c0_7, %c0_8] : memref<8x256xf32, #tpu.memory_space<vmem>>, vector<8x256xf32>
    tpu.vector_store %arg5[%c0_7, %c0_8], %74 {strides = array<i32>} : memref<8x256xf32, #tpu.memory_space<vmem>>, vector<8x256xf32>,
    return
  }
  func.func @transform_0(%arg0: i32) -> (i32, i32) {
    %c0_i32 = arith.constant 0 : i32
    %c0_i32_0 = arith.constant 0 : i32
    return %arg0, %c0_i32 : i32, i32
  }
  func.func @transform_1(%arg0: i32) -> (i32, i32) {
    %c0_i32 = arith.constant 0 : i32
    %c0_i32_0 = arith.constant 0 : i32
    %c0_i32_1 = arith.constant 0 : i32
    return %c0_i32, %c0_i32_0 : i32, i32
  }
  func.func @transform_2(%arg0: i32) -> (i32, i32) {
    %c0_i32 = arith.constant 0 : i32
    %c0_i32_0 = arith.constant 0 : i32
    %c0_i32_1 = arith.constant 0 : i32
    return %c0_i32, %c0_i32_0 : i32, i32
  }
  func.func @transform_3(%arg0: i32) -> (i32, i32) {
    %c0_i32 = arith.constant 0 : i32
    %c0_i32_0 = arith.constant 0 : i32
    %c0_i32_1 = arith.constant 0 : i32
    return %c0_i32, %c0_i32_0 : i32, i32
  }
  func.func @transform_4(%arg0: i32) -> (i32, i32) {
    %c0_i32 = arith.constant 0 : i32
    %c0_i32_0 = arith.constant 0 : i32
    return %arg0, %c0_i32 : i32, i32
  }
}

</mosaic_0001>

<llo_original>
// kernel: tpu_custom_call.1
$region0: #{tpu_custom_call.1}
  #allocation0 [shape = 'u32[]', space=smem, size = 0x4, offset = 0x4, fixed_abs, tag = 'smem constant byte address 0x4 - core index']
  #allocation1 [shape = 'u32[144,128]{1,0:T(1,128)}', space=vmem, size = 0x12000, scoped, tag = 'internal scratch']
  %s0 = inlined_call_operand.hbm [shape: f32[16,256], index: 0, kind: input, shape index: {}]
  %s1 = inlined_call_operand.vmem [shape: f32[8,9], index: 1, kind: input, shape index: {}]
  %s2 = inlined_call_operand.hbm [shape: f32[9,256], index: 2, kind: input, shape index: {}]
  %s3 = inlined_call_operand.vmem [shape: f32[8,1], index: 3, kind: input, shape index: {}]
  %s4 = inlined_call_operand.hbm [shape: f32[16,256], index: 4, kind: output, shape index: {}]
  %s5 = sld [smem:[#allocation0]]
  $region57: #{tpu_custom_call.1} parent=0
    _
  %s7 = ssub.s32 1, %s5
  %s8 = scalar_select 0, %s7, %s5
  $region1: #{tpu_custom_call.1} parent=0
    #allocation2 [shape = 'u8[16384]{0}', space=vmem, size = 0x4000, scoped, tag = 'input window, operand 0']
    #allocation3 [shape = 's32[2]{0}', space=sflag, size = 0x8, scoped, tag = 'scoped memory for tpu_custom_call.1']
    #allocation4 [shape = 's32[2]{0}', space=sflag, size = 0x8, scoped, tag = 'scoped memory for tpu_custom_call.1']
    #allocation5 [shape = 'u8[16384]{0}', space=vmem, size = 0x4000, scoped, tag = 'input window, operand 2, single buffered']
    #allocation6 [shape = 's32[1]{0}', space=sflag, size = 0x4, scoped, tag = 'scoped memory for tpu_custom_call.1']
    #allocation7 [shape = 'u8[16384]{0}', space=vmem, size = 0x4000, scoped, tag = 'output window, operand 0']
    %9 = vsyncpa [#allocation3], 0
    %s10 = scalar_lea.sflag [#allocation3], 1
    %11 = vsyncpa %s10, 0
    %12 = vsyncpa [#allocation6], 0
    %13 = vsyncpa [#allocation4], 0
    %s14 = scalar_lea.sflag [#allocation4], 1
    %15 = vsyncpa %s14, 0
    loop: start=0, step=1, limit=4
    $region2: #{tpu_custom_call.1} parent=1 // loop_pre_header
      _
    $region3: #{tpu_custom_call.1} parent=1 // loop_header
      %s17 = sphi 0, %s21
      %p18 = scmp.ge.s32.totalorder %s17, 4
      %s27 = sphi 0, %s29
      %s30 = sphi 0, %s27
      %s31 = sphi 0, %s30
      %s47 = sphi 0, %s31
      %s51 = sphi 0, %s51
      %s53 = sphi 0, %s51
      %s54 = sphi 0, %s53
      %s68 = sphi 0, %s54
      %s72 = sphi 0, %s72
      %s74 = sphi 0, %s72
      %s75 = sphi 0, %s74
      %s89 = sphi 0, %s75
      %s93 = sphi 0, %s93
      %s95 = sphi 0, %s93
      %s96 = sphi 0, %s95
      %s110 = sphi 0, %s96
      %s116 = sphi 0, %s118
      %s119 = sphi 0, %s116
      %s120 = sphi 0, %s119
      %s136 = sphi 0, %s120
    $region4: #{tpu_custom_call.1} parent=1 // loop_header_branch
      %20 = sbr.rel (%p18) target = $region8
    $region5: #{tpu_custom_call.1} parent=1 // loop_body
      %s22 = ssub.s32 %s17, 1
      %s23 = ssub.s32 %s17, 2
      %s24 = sadd.s32 %s17, 1
      %s25 = ssub.s32 %s17, %s24
      %p26 = scmp.eq.s32.totalorder %s25, 0
      %s28 = sadd.s32 %s27, 1
      %s29 = scalar_select %p26, %s27, %s28
      %p32 = pneg %p26
      %p33 = scmp.eq.s32.totalorder %s17, 1
      %p34 = por %p32, %p33
      %p35 = scmp.ne.s32.totalorder %s27, %s30
      %p36 = scmp.eq.s32.totalorder %s17, 0
      %p37 = por %p35, %p36
      %p38 = scmp.ne.s32.totalorder %s27, %s30
      %p39 = scmp.eq.s32.totalorder %s22, 1
      %p40 = por %p38, %p39
      %p41 = scmp.ne.s32.totalorder %s30, %s31
      %p42 = scmp.eq.s32.totalorder %s22, 0
      %p43 = por %p41, %p42
      %p44 = scmp.ne.s32.totalorder %s30, %s31
      %p45 = scmp.eq.s32.totalorder %s23, 1
      %p46 = por %p44, %p45
      %p48 = scmp.ne.s32.totalorder %s31, %s47
      %p49 = scmp.eq.s32.totalorder %s23, 0
      %p50 = por %p48, %p49
      %s52 = sadd.s32 %s51, 1
      %p55 = scmp.eq.s32.totalorder %s17, 1
      %p56 = scmp.ne.s32.totalorder %s51, %s53
      %p57 = scmp.eq.s32.totalorder %s17, 0
      %p58 = por %p56, %p57
      %p59 = scmp.ne.s32.totalorder %s51, %s53
      %p60 = scmp.eq.s32.totalorder %s22, 1
      %p61 = por %p59, %p60
      %p62 = scmp.ne.s32.totalorder %s53, %s54
      %p63 = scmp.eq.s32.totalorder %s22, 0
      %p64 = por %p62, %p63
      %p65 = scmp.ne.s32.totalorder %s53, %s54
      %p66 = scmp.eq.s32.totalorder %s23, 1
      %p67 = por %p65, %p66
      %p69 = scmp.ne.s32.totalorder %s54, %s68
      %p70 = scmp.eq.s32.totalorder %s23, 0
      %p71 = por %p69, %p70
      %s73 = sadd.s32 %s72, 1
      %p76 = scmp.eq.s32.totalorder %s17, 1
      %p77 = scmp.ne.s32.totalorder %s72, %s74
      %p78 = scmp.eq.s32.totalorder %s17, 0
      %p79 = por %p77, %p78
      %p80 = scmp.ne.s32.totalorder %s72, %s74
      %p81 = scmp.eq.s32.totalorder %s22, 1
      %p82 = por %p80, %p81
      %p83 = scmp.ne.s32.totalorder %s74, %s75
      %p84 = scmp.eq.s32.totalorder %s22, 0
      %p85 = por %p83, %p84
      %p86 = scmp.ne.s32.totalorder %s74, %s75
      %p87 = scmp.eq.s32.totalorder %s23, 1
      %p88 = por %p86, %p87
      %p90 = scmp.ne.s32.totalorder %s75, %s89
      %p91 = scmp.eq.s32.totalorder %s23, 0
      %p92 = por %p90, %p91
      %s94 = sadd.s32 %s93, 1
      %p97 = scmp.eq.s32.totalorder %s17, 1
      %p98 = scmp.ne.s32.totalorder %s93, %s95
      %p99 = scmp.eq.s32.totalorder %s17, 0
      %p100 = por %p98, %p99
      %p101 = scmp.ne.s32.totalorder %s93, %s95
      %p102 = scmp.eq.s32.totalorder %s22, 1
      %p103 = por %p101, %p102
      %p104 = scmp.ne.s32.totalorder %s95, %s96
      %p105 = scmp.eq.s32.totalorder %s22, 0
      %p106 = por %p104, %p105
      %p107 = scmp.ne.s32.totalorder %s95, %s96
      %p108 = scmp.eq.s32.totalorder %s23, 1
      %p109 = por %p107, %p108
      %p111 = scmp.ne.s32.totalorder %s96, %s110
      %p112 = scmp.eq.s32.totalorder %s23, 0
      %p113 = por %p111, %p112
      %s114 = ssub.s32 %s17, %s24
      %p115 = scmp.eq.s32.totalorder %s114, 0
      %s117 = sadd.s32 %s116, 1
      %s118 = scalar_select %p115, %s116, %s117
      %p121 = pneg %p115
      %p122 = scmp.eq.s32.totalorder %s17, 1
      %p123 = por %p121, %p122
      %p124 = scmp.ne.s32.totalorder %s116, %s119
      %p125 = scmp.eq.s32.totalorder %s17, 0
      %p126 = por %p124, %p125
      %p127 = scmp.ne.s32.totalorder %s116, %s119
      %p128 = scmp.eq.s32.totalorder %s22, 1
      %p129 = por %p127, %p128
      %p130 = scmp.ne.s32.totalorder %s119, %s120
      %p131 = scmp.eq.s32.totalorder %s22, 0
      %p132 = por %p130, %p131
      %p133 = scmp.ne.s32.totalorder %s119, %s120
      %p134 = scmp.eq.s32.totalorder %s23, 1
      %p135 = por %p133, %p134
      %p137 = scmp.ne.s32.totalorder %s120, %s136
      %p138 = scmp.eq.s32.totalorder %s23, 0
      %p139 = por %p137, %p138
      %p140 = scmp.le.s32.totalorder 1, %s17
      %p141 = scmp.lt.s32.totalorder %s17, 3
      %p142 = pnand %p140, %p141
      %p143 = pneg %p142
      // Predicated region
      $region9: #{tpu_custom_call.1} parent=5 // pred_check
        _
      $region10: #{tpu_custom_call.1} parent=5 // pred_check_branch
        %145 = sbr.rel (%p142) target = $region12
      $region11: #{tpu_custom_call.1} parent=5 // pred_region
        %s146 = ssub.s32 %s17, 1
        // Predicated region
        $region13: #{tpu_custom_call.1} parent=11 // pred_check
          %p147 = pneg %p64
        $region14: #{tpu_custom_call.1} parent=11 // pred_check_branch
          %149 = sbr.rel (%p147) target = $region16
        $region15: #{tpu_custom_call.1} parent=11 // pred_region
          _
        $region16: #{tpu_custom_call.1} parent=11 // pred_fallthru
          _
        // Predicated region
        $region17: #{tpu_custom_call.1} parent=11 // pred_check
          %p150 = pneg %p85
        $region18: #{tpu_custom_call.1} parent=11 // pred_check_branch
          %152 = sbr.rel (%p150) target = $region20
        $region19: #{tpu_custom_call.1} parent=11 // pred_region
          %s154 = ssub.s32 512, 512
          %155 = vsyncadd [#allocation6], %s154
          %s156 = sshll.u32 [#allocation5], 4
          %s157 = int_to_ptr.vmem [resolvable:$true] %s156
          %162 = dma.hbm_to_vmem [thread:$0]  %s2, 512, %s157, [#allocation6], 256, 256, 16
        $region20: #{tpu_custom_call.1} parent=11 // pred_fallthru
          _
        // Predicated region
        $region21: #{tpu_custom_call.1} parent=11 // pred_check
          %p163 = pneg %p106
        $region22: #{tpu_custom_call.1} parent=11 // pred_check_branch
          %165 = sbr.rel (%p163) target = $region24
        $region23: #{tpu_custom_call.1} parent=11 // pred_region
          _
        $region24: #{tpu_custom_call.1} parent=11 // pred_fallthru
          _
      $region12: #{tpu_custom_call.1} parent=5 // pred_fallthru
        _
      %p166 = scmp.lt.s32.totalorder %s17, 2
      // Predicated region
      $region25: #{tpu_custom_call.1} parent=5 // pred_check
        %p167 = pneg %p166
      $region26: #{tpu_custom_call.1} parent=5 // pred_check_branch
        %169 = sbr.rel (%p167) target = $region28
      $region27: #{tpu_custom_call.1} parent=5 // pred_region
        // Predicated region
        $region29: #{tpu_custom_call.1} parent=27 // pred_check
          %p170 = pneg %p37
        $region30: #{tpu_custom_call.1} parent=27 // pred_check_branch
          %172 = sbr.rel (%p170) target = $region32
        $region31: #{tpu_custom_call.1} parent=27 // pred_region
          %s173 = sand.u32 %s27, 1
          %s174 = scalar_lea.sflag [#allocation3], %s173
          %s175 = sand.u32 %s27, 1
          %s176 = smul.addr %s175, 16
          %s177 = scalar_lea.vmem [#allocation2], %s176
          %s179 = ssub.s32 256, 256
          %180 = vsyncadd %s174, %s179
          %s181 = smul.addr %s17, 2
          %s182 = smul.addr %s181, 128
          %s183 = scalar_lea.hbm %s0, %s182
          %s185 = sshll.u32 %s177, 4
          %s186 = int_to_ptr.vmem [resolvable:$true] %s185
          %188 = dma.hbm_to_vmem [thread:$0]  %s183, 256, %s186, %s174
        $region32: #{tpu_custom_call.1} parent=27 // pred_fallthru
          _
      $region28: #{tpu_custom_call.1} parent=5 // pred_fallthru
        _
      %p189 = scmp.le.s32.totalorder 1, %s17
      %p190 = scmp.lt.s32.totalorder %s17, 3
      %p191 = pnand %p189, %p190
      %p192 = pneg %p191
      // Predicated region
      $region33: #{tpu_custom_call.1} parent=5 // pred_check
        _
      $region34: #{tpu_custom_call.1} parent=5 // pred_check_branch
        %194 = sbr.rel (%p191) target = $region36
      $region35: #{tpu_custom_call.1} parent=5 // pred_region
        %s195 = ssub.s32 %s17, 1
        %s196 = sand.u32 %s30, 1
        %s197 = scalar_lea.sflag [#allocation3], %s196
        %s198 = sand.u32 %s30, 1
        %s199 = smul.addr %s198, 16
        %s200 = scalar_lea.vmem [#allocation2], %s199
        // Predicated region
        $region37: #{tpu_custom_call.1} parent=35 // pred_check
          %p201 = pneg %p43
        $region38: #{tpu_custom_call.1} parent=35 // pred_check_branch
          %203 = sbr.rel (%p201) target = $region40
        $region39: #{tpu_custom_call.1} parent=35 // pred_region
          %204 = dma.done %s197, 256
        $region40: #{tpu_custom_call.1} parent=35 // pred_fallthru
          _
        // Predicated region
        $region41: #{tpu_custom_call.1} parent=35 // pred_check
          %p205 = pneg %p85
        $region42: #{tpu_custom_call.1} parent=35 // pred_check_branch
          %207 = sbr.rel (%p205) target = $region44
        $region43: #{tpu_custom_call.1} parent=35 // pred_region
          %208 = dma.done [#allocation6], 512
        $region44: #{tpu_custom_call.1} parent=35 // pred_fallthru
          _
        %s209 = sand.u32 %s30, 1
        %s210 = scalar_lea.sflag [#allocation3], %s209
        %s211 = sand.u32 %s30, 1
        %s212 = smul.addr %s211, 16
        %s213 = scalar_lea.vmem [#allocation2], %s212
        %p214 = pneg %p43
        %p215 = pneg %p40
        %p216 = pneg %p64
        %p217 = pneg %p61
        %p218 = pneg %p85
        %p219 = pneg %p82
        %p220 = pneg %p106
        %p221 = pneg %p103
        %p222 = pneg %p132
        %p223 = pneg %p129
        %s224 = sand.u32 %s119, 1
        %s225 = scalar_lea.sflag [#allocation4], %s224
        %s226 = sand.u32 %s119, 1
        %s227 = smul.addr %s226, 16
        %s228 = scalar_lea.vmem [#allocation7], %s227
        %v229 = vld [vmem:[%s200] sm:$0xff]
        %v230 = vld [vmem:[%s200 + $0x8] sm:$0xff]
        %v231 = vld [vmem:[%s1] sm:$0xff]
        %v232 = vld [vmem:[#allocation5] sm:$0xff]
        %v233 = vld [vmem:[#allocation5 + $0x8] sm:$0xff]
        %v234 = vld [vmem:[#allocation5 + $0x10] sm:$0x1]
        %v235 = vld [vmem:[#allocation5 + $0x18] sm:$0x1]
        %236 = vrot.lane.b32.xlu0 %v229, 17
        %v237 = vpop.permute.xlu0 %236
        %238 = vrot.lane.b32.xlu0 %v230, 17
        %v239 = vpop.permute.xlu0 %238
        %v240 = vlaneseq
        %v241 = vand.u32 %v240, 127
        %vm242 = vcmp.lt.s32.totalorder %v241, 17
        %v243 = vsel %vm242, %v237, %v239
        %v244 = vsel %vm242, %v239, %v237
        %246 = vset.pattern.permute.xlu0 0
        %247 = vperm.xlu0 %246, %v231
        %v248 = vpop.permute.xlu0 %247
        %v250 = vmul.f32 %v244, %v248
        %v251 = vmul.f32 %v243, %v248
        %v252 = vlaneseq
        %v253 = vshrl.u32 %v252, 7
        %v254 = vsub.s32 0, %v253
        %v255 = vrot.slane %v232, %v254
        %v256 = vlaneseq
        %v257 = vshrl.u32 %v256, 7
        %v258 = vsub.s32 0, %v257
        %v259 = vrot.slane %v233, %v258
        %v260 = vmul.f32 %v250, %v255
        %v261 = vmul.f32 %v251, %v259
        %262 = vrot.lane.b32.xlu0 %v229, 16
        %v263 = vpop.permute.xlu0 %262
        %264 = vrot.lane.b32.xlu0 %v230, 16
        %v265 = vpop.permute.xlu0 %264
        %vm266 = vcmp.lt.s32.totalorder %v241, 16
        %v267 = vsel %vm266, %v263, %v265
        %v268 = vsel %vm266, %v265, %v263
        %269 = vset.pattern.permute.xlu0 1
        %270 = vperm.xlu0 %269, %v231
        %v271 = vpop.permute.xlu0 %270
        %v273 = vmul.f32 %v268, %v271
        %v274 = vmul.f32 %v267, %v271
        %v275 = vlaneseq
        %v276 = vshrl.u32 %v275, 7
        %v277 = vsub.s32 1, %v276
        %v278 = vrot.slane %v232, %v277
        %v279 = vlaneseq
        %v280 = vshrl.u32 %v279, 7
        %v281 = vsub.s32 1, %v280
        %v282 = vrot.slane %v233, %v281
        %v283 = vmul.f32 %v273, %v278
        %v284 = vmul.f32 %v274, %v282
        %v285 = vadd.f32 %v260, %v283
        %v286 = vadd.f32 %v261, %v284
        %287 = vrot.lane.b32.xlu0 %v229, 15
        %v288 = vpop.permute.xlu0 %287
        %289 = vrot.lane.b32.xlu0 %v230, 15
        %v290 = vpop.permute.xlu0 %289
        %vm291 = vcmp.lt.s32.totalorder %v241, 15
        %v292 = vsel %vm291, %v288, %v290
        %v293 = vsel %vm291, %v290, %v288
        %294 = vset.pattern.permute.xlu0 2
        %295 = vperm.xlu0 %294, %v231
        %v296 = vpop.permute.xlu0 %295
        %v298 = vmul.f32 %v293, %v296
        %v299 = vmul.f32 %v292, %v296
        %v300 = vlaneseq
        %v301 = vshrl.u32 %v300, 7
        %v302 = vsub.s32 2, %v301
        %v303 = vrot.slane %v232, %v302
        %v304 = vlaneseq
        %v305 = vshrl.u32 %v304, 7
        %v306 = vsub.s32 2, %v305
        %v307 = vrot.slane %v233, %v306
        %v308 = vmul.f32 %v298, %v303
        %v309 = vmul.f32 %v299, %v307
        %v310 = vadd.f32 %v285, %v308
        %v311 = vadd.f32 %v286, %v309
        %312 = vrot.lane.b32.xlu0 %v229, 1
        %v313 = vpop.permute.xlu0 %312
        %314 = vrot.lane.b32.xlu0 %v230, 1
        %v315 = vpop.permute.xlu0 %314
        %vm316 = vcmp.lt.s32.totalorder %v241, 1
        %v317 = vsel %vm316, %v313, %v315
        %v318 = vsel %vm316, %v315, %v313
        %319 = vset.pattern.permute.xlu0 3
        %320 = vperm.xlu0 %319, %v231
        %v321 = vpop.permute.xlu0 %320
        %v323 = vmul.f32 %v318, %v321
        %v324 = vmul.f32 %v317, %v321
        %v325 = vlaneseq
        %v326 = vshrl.u32 %v325, 7
        %v327 = vsub.s32 3, %v326
        %v328 = vrot.slane %v232, %v327
        %v329 = vlaneseq
        %v330 = vshrl.u32 %v329, 7
        %v331 = vsub.s32 3, %v330
        %v332 = vrot.slane %v233, %v331
        %v333 = vmul.f32 %v323, %v328
        %v334 = vmul.f32 %v324, %v332
        %v335 = vadd.f32 %v310, %v333
        %v336 = vadd.f32 %v311, %v334
        %337 = vset.pattern.permute.xlu0 4
        %338 = vperm.xlu0 %337, %v231
        %v339 = vpop.permute.xlu0 %338
        %v341 = vmul.f32 %v229, %v339
        %v342 = vmul.f32 %v230, %v339
        %v343 = vadd.f32 %v335, %v341
        %v344 = vadd.f32 %v336, %v342
        %345 = vrot.lane.b32.xlu0 %v229, 127
        %v346 = vpop.permute.xlu0 %345
        %347 = vrot.lane.b32.xlu0 %v230, 127
        %v348 = vpop.permute.xlu0 %347
        %vm349 = vcmp.lt.s32.totalorder %v241, 127
        %v350 = vsel %vm349, %v346, %v348
        %v351 = vsel %vm349, %v348, %v346
        %352 = vset.pattern.permute.xlu0 5
        %353 = vperm.xlu0 %352, %v231
        %v354 = vpop.permute.xlu0 %353
        %v356 = vmul.f32 %v350, %v354
        %v357 = vmul.f32 %v351, %v354
        %v358 = vlaneseq
        %v359 = vshrl.u32 %v358, 7
        %v360 = vsub.s32 5, %v359
        %v361 = vrot.slane %v232, %v360
        %v362 = vlaneseq
        %v363 = vshrl.u32 %v362, 7
        %v364 = vsub.s32 5, %v363
        %v365 = vrot.slane %v233, %v364
        %v366 = vmul.f32 %v356, %v361
        %v367 = vmul.f32 %v357, %v365
        %v368 = vadd.f32 %v343, %v366
        %v369 = vadd.f32 %v344, %v367
        %370 = vrot.lane.b32.xlu0 %v229, 113
        %v371 = vpop.permute.xlu0 %370
        %372 = vrot.lane.b32.xlu0 %v230, 113
        %v373 = vpop.permute.xlu0 %372
        %vm374 = vcmp.lt.s32.totalorder %v241, 113
        %v375 = vsel %vm374, %v371, %v373
        %v376 = vsel %vm374, %v373, %v371
        %377 = vset.pattern.permute.xlu0 6
        %378 = vperm.xlu0 %377, %v231
        %v379 = vpop.permute.xlu0 %378
        %v381 = vmul.f32 %v375, %v379
        %v382 = vmul.f32 %v376, %v379
        %v383 = vlaneseq
        %v384 = vshrl.u32 %v383, 7
        %v385 = vsub.s32 6, %v384
        %v386 = vrot.slane %v232, %v385
        %v387 = vlaneseq
        %v388 = vshrl.u32 %v387, 7
        %v389 = vsub.s32 6, %v388
        %v390 = vrot.slane %v233, %v389
        %v391 = vmul.f32 %v381, %v386
        %v392 = vmul.f32 %v382, %v390
        %v393 = vadd.f32 %v368, %v391
        %v394 = vadd.f32 %v369, %v392
        %395 = vrot.lane.b32.xlu0 %v229, 112
        %v396 = vpop.permute.xlu0 %395
        %397 = vrot.lane.b32.xlu0 %v230, 112
        %v398 = vpop.permute.xlu0 %397
        %vm399 = vcmp.lt.s32.totalorder %v241, 112
        %v400 = vsel %vm399, %v396, %v398
        %v401 = vsel %vm399, %v398, %v396
        %402 = vset.pattern.permute.xlu0 7
        %403 = vperm.xlu0 %402, %v231
        %v404 = vpop.permute.xlu0 %403
        %v406 = vmul.f32 %v400, %v404
        %v407 = vmul.f32 %v401, %v404
        %v408 = vlaneseq
        %v409 = vshrl.u32 %v408, 7
        %v410 = vsub.s32 7, %v409
        %v411 = vrot.slane %v232, %v410
        %v412 = vlaneseq
        %v413 = vshrl.u32 %v412, 7
        %v414 = vsub.s32 7, %v413
        %v415 = vrot.slane %v233, %v414
        %v416 = vmul.f32 %v406, %v411
        %v417 = vmul.f32 %v407, %v415
        %v418 = vadd.f32 %v393, %v416
        %v419 = vadd.f32 %v394, %v417
        %420 = vrot.lane.b32.xlu0 %v229, 111
        %v421 = vpop.permute.xlu0 %420
        %422 = vrot.lane.b32.xlu0 %v230, 111
        %v423 = vpop.permute.xlu0 %422
        %vm424 = vcmp.lt.s32.totalorder %v241, 111
        %v425 = vsel %vm424, %v421, %v423
        %v426 = vsel %vm424, %v423, %v421
        %427 = vset.pattern.permute.xlu0 8
        %428 = vperm.xlu0 %427, %v231
        %v429 = vpop.permute.xlu0 %428
        %v431 = vmul.f32 %v425, %v429
        %v432 = vmul.f32 %v426, %v429
        %v433 = vlaneseq
        %v434 = vshrl.u32 %v433, 7
        %v435 = vsub.s32 0, %v434
        %v436 = vrot.slane %v234, %v435
        %v437 = vlaneseq
        %v438 = vshrl.u32 %v437, 7
        %v439 = vsub.s32 0, %v438
        %v440 = vrot.slane %v235, %v439
        %v441 = vmul.f32 %v431, %v436
        %v442 = vmul.f32 %v432, %v440
        %v443 = vadd.f32 %v418, %v441
        %v444 = vadd.f32 %v419, %v442
        %v445 = vld [vmem:[%s3] sm:$0xff]
        %447 = vset.pattern.permute.xlu0 0
        %448 = vperm.xlu0 %447, %v445
        %v449 = vpop.permute.xlu0 %448
        %v451 = vadd.f32 %v443, %v449
        %v452 = vadd.f32 %v444, %v449
        %v453 = vmax.f32 %v451, 0.0
        %v454 = vmax.f32 %v452, 0.0
        %455 = vst [vmem:[%s228] sm:$0xff] %v453
        %456 = vst [vmem:[%s228 + $0x8] sm:$0xff] %v454
        %s457 = sand.u32 %s119, 1
        %s458 = scalar_lea.sflag [#allocation4], %s457
        %s459 = sand.u32 %s119, 1
        %s460 = smul.addr %s459, 16
        %s461 = scalar_lea.vmem [#allocation7], %s460
        // Predicated region
        $region45: #{tpu_custom_call.1} parent=35 // pred_check
          %p462 = pneg %p129
        $region46: #{tpu_custom_call.1} parent=35 // pred_check_branch
          %464 = sbr.rel (%p462) target = $region48
        $region47: #{tpu_custom_call.1} parent=35 // pred_region
          %s466 = ssub.s32 256, 256
          %467 = vsyncadd %s458, %s466
          %s468 = smul.addr %s22, 2
          %s469 = smul.addr %s468, 128
          %s470 = scalar_lea.hbm %s4, %s469
          %s472 = sshll.u32 %s461, 4
          %s473 = int_to_ptr.vmem [resolvable:$true] %s472
          %475 = dma.vmem_to_hbm [thread:$0]  %s473, 256, %s470, %s458
        $region48: #{tpu_custom_call.1} parent=35 // pred_fallthru
          _
      $region36: #{tpu_custom_call.1} parent=5 // pred_fallthru
        _
      %p476 = scmp.le.s32.totalorder 2, %s17
      // Predicated region
      $region49: #{tpu_custom_call.1} parent=5 // pred_check
        %p477 = pneg %p476
      $region50: #{tpu_custom_call.1} parent=5 // pred_check_branch
        %479 = sbr.rel (%p477) target = $region52
      $region51: #{tpu_custom_call.1} parent=5 // pred_region
        %s480 = ssub.s32 %s17, 2
        // Predicated region
        $region53: #{tpu_custom_call.1} parent=51 // pred_check
          %p481 = pneg %p135
        $region54: #{tpu_custom_call.1} parent=51 // pred_check_branch
          %483 = sbr.rel (%p481) target = $region56
        $region55: #{tpu_custom_call.1} parent=51 // pred_region
          %s484 = sand.u32 %s120, 1
          %s485 = scalar_lea.sflag [#allocation4], %s484
          %s486 = sand.u32 %s120, 1
          %s487 = smul.addr %s486, 16
          %s488 = scalar_lea.vmem [#allocation7], %s487
          %489 = dma.done %s485, 256
        $region56: #{tpu_custom_call.1} parent=51 // pred_fallthru
          _
      $region52: #{tpu_custom_call.1} parent=5 // pred_fallthru
        _
    $region6: #{tpu_custom_call.1} parent=1 // loop_footer
      %s21 = sadd.s32 1, %s17
    $region7: #{tpu_custom_call.1} parent=1 // loop_footer_branch
      %16 = sbr.rel target = $region3
    $region8: #{tpu_custom_call.1} parent=1 // loop_exit
      _
    %490 = vsyncpa [#allocation3], 1
    %s491 = scalar_lea.sflag [#allocation3], 1
    %492 = vsyncpa %s491, 1
    %493 = vsyncpa [#allocation6], 1
    %494 = vsyncpa [#allocation4], 1
    %s495 = scalar_lea.sflag [#allocation4], 1
    %496 = vsyncpa %s495, 1

</llo_original>
